<compile_context>
chip_gen: v7x
topology: tpu7x:2x2x1
jax: 0.10.0
libtpu: 0.0.40
codegen_flags: <defaults>
</compile_context>

<pallas_src>
import functools

import jax
import jax.numpy as jnp
from jax.experimental import pallas as pl
from jax.experimental.pallas import tpu as pltpu

_LANES = 128
# 8192 rows x 128 lanes x f32 = 4 MiB per input per pipeline buffer.
# 3 inputs x 2 buffers = 24 MiB: fits v7x's 64 MiB/TC VMEM, trivial on v5e/v6e.
_MAX_BLOCK_ROWS = 8192
_VMEM_LIMIT = 48 * 1024 * 1024


def _num_tensorcores():
    """2 on v7x-class chips (2 TensorCores/chip), else 1.  Perf hint only."""
    try:
        kind = jax.devices()[0].device_kind.lower()
    except Exception:
        return 1
    return 2 if ("v7" in kind or "tpu7" in kind) else 1


_NUM_TC = _num_tensorcores()


def _total_loss_kernel(pred_ref, truth_ref, mask_ref, sum_ref, cnt_ref, *,
                       blocks_per_core, nblocks, block_rows, rows_last,
                       has_core_axis, has_phantom, hard_labels):
    if has_core_axis:
        c = pl.program_id(0)            # per-TensorCore ("parallel") axis
        i = pl.program_id(1)            # streaming reduction ("arbitrary") axis
        blk = c * blocks_per_core + i
    else:
        i = pl.program_id(0)
        blk = i

    @pl.when(i == 0)
    def _():
        sum_ref[...] = jnp.zeros_like(sum_ref)
        cnt_ref[...] = jnp.zeros_like(cnt_ref)

    def accumulate(valid_rows):
        p = pred_ref[...].astype(jnp.float32)
        # Native-dtype compare (no f32 cast of the mask).
        valid = mask_ref[...] > 0
        if valid_rows is not None:
            # Ragged last block only: rows past `valid_rows` are stale VMEM —
            # even their mask bytes cannot be trusted, so force-invalidate.
            row_ids = jax.lax.broadcasted_iota(jnp.int32, valid.shape, 0)
            valid = valid & (row_ids < valid_rows)
        if hard_labels:
            # Hard {0,1} labels: one transcendental instead of two.
            x = jnp.where(truth_ref[...] > 0.5, p, 1.0 - p)
            bce = -jnp.maximum(jnp.log(x), -100.0)
        else:
            t = truth_ref[...].astype(jnp.float32)
            log_p = jnp.maximum(jnp.log(p), -100.0)       # torch BCE log clamp
            log_1mp = jnp.maximum(jnp.log1p(-p), -100.0)
            bce = -(t * log_p + (1.0 - t) * log_1mp)
        # `where` is a select, so NaN/Inf from pad/garbage data never leaks.
        bce = jnp.where(valid, bce, 0.0)
        # Lane-vector (1,128) accumulators: sublane reduce only per step; the
        # single cross-lane reduce + divide happen once in the wrapper.
        # (f32 per-lane counts are exact up to 2^24 elements per lane.)
        sum_ref[...] += jnp.sum(bce, axis=0, keepdims=True)
        cnt_ref[...] += jnp.sum(valid.astype(jnp.float32), axis=0, keepdims=True)

    has_ragged = rows_last != block_rows
    if has_ragged:
        @pl.when(blk < nblocks - 1)      # interior blocks: mask>0 is enough
        def _():
            accumulate(None)

        @pl.when(blk == nblocks - 1)     # only block that can hold garbage rows
        def _():
            accumulate(rows_last)
    elif has_phantom:
        @pl.when(blk < nblocks)          # phantom (clamped) blocks contribute 0
        def _():
            accumulate(None)
    else:
        accumulate(None)


@functools.partial(jax.jit,
                   static_argnames=("assume_hard_labels", "max_block_rows"))
def total_loss(pred, truth, cluster_loss, mask, *,
               assume_hard_labels=False, max_block_rows=_MAX_BLOCK_ROWS):
    """Masked BCE (mean) + 0.001 * cluster_loss, matching ClusterKT totalloss."""
    n = pred.size                        # static under jit
    p = pred.reshape(-1)
    t = truth.reshape(-1)
    m = mask.reshape(-1)

    rows = -(-n // _LANES)
    pad = rows * _LANES - n
    if pad:
        # TODO(synk): this fallback materializes full padded copies of all
        # three inputs (~extra HBM pass each).  A manual-DMA (memory_space=
        # pl.ANY) tail path would remove it; 128-divisible inputs never hit it.
        p = jnp.pad(p, (0, pad))
        t = jnp.pad(t, (0, pad))
        m = jnp.pad(m, (0, pad))
    p2 = p.reshape(rows, _LANES)
    t2 = t.reshape(rows, _LANES)
    m2 = m.reshape(rows, _LANES)

    if rows > max_block_rows:
        assert max_block_rows % 8 == 0, "block rows must be sublane-aligned"
        block_rows = max_block_rows
    else:
        block_rows = rows                # full dim -> always a legal block
    nblocks = -(-rows // block_rows)
    rows_last = rows - (nblocks - 1) * block_rows

    num_cores = _NUM_TC if nblocks >= _NUM_TC else 1
    bpc = -(-nblocks // num_cores)       # blocks per core
    has_phantom = num_cores * bpc > nblocks

    if num_cores == 1:
        # Single-TensorCore chips (v5e/v6e): plain 1-D grid, no clamp, no
        # phantom blocks.
        grid = (nblocks,)
        in_map = lambda i: (i, 0)
        out_map = lambda i: (0, 0, 0)
        dim_sem = ("arbitrary",)
    else:
        grid = (num_cores, bpc)
        if has_phantom:
            # Phantom blocks are clamped onto the last real block; the kernel
            # skips them with a scalar pl.when.
            in_map = lambda c, i: (jnp.minimum(c * bpc + i, nblocks - 1), 0)
        else:
            in_map = lambda c, i: (c * bpc + i, 0)
        out_map = lambda c, i: (c, 0, 0)
        # TODO(synk): on v7x verify in the Mosaic dump that this axis really
        # shards across both TensorCores; if not, switch to pltpu.CORE_PARALLEL.
        dim_sem = ("parallel", "arbitrary")

    data_spec = pl.BlockSpec((block_rows, _LANES), in_map)
    out_spec = pl.BlockSpec((None, 1, _LANES), out_map)
    out_shape = jax.ShapeDtypeStruct((num_cores, 1, _LANES), jnp.float32)

    kernel = functools.partial(
        _total_loss_kernel,
        blocks_per_core=bpc, nblocks=nblocks, block_rows=block_rows,
        rows_last=rows_last, has_core_axis=(num_cores > 1),
        has_phantom=has_phantom, hard_labels=assume_hard_labels)

    sum_out, cnt_out = pl.pallas_call(
        kernel,
        out_shape=(out_shape, out_shape),
        grid_spec=pltpu.PrefetchScalarGridSpec(
            num_scalar_prefetch=0,
            grid=grid,
            in_specs=[data_spec, data_spec, data_spec],
            out_specs=(out_spec, out_spec),
        ),
        compiler_params=pltpu.CompilerParams(
            dimension_semantics=dim_sem,
            vmem_limit_bytes=_VMEM_LIMIT),
    )(p2, t2, m2)

    # Single cross-lane reduce, division and cluster term outside the kernel.
    mean_bce = jnp.sum(sum_out) / jnp.sum(cnt_out)
    return mean_bce + 0.001 * cluster_loss


def _reference(pred, truth, cluster_loss, mask):
    m = mask.reshape(-1).astype(jnp.float32) > 0.0
    p = pred.reshape(-1).astype(jnp.float32)
    t = truth.reshape(-1).astype(jnp.float32)
    log_p = jnp.maximum(jnp.log(p), -100.0)
    log_1mp = jnp.maximum(jnp.log1p(-p), -100.0)
    bce = -(t * log_p + (1.0 - t) * log_1mp)
    bce = jnp.where(m, bce, 0.0)
    return jnp.sum(bce) / jnp.sum(m.astype(jnp.float32)) + 0.001 * cluster_loss


if __name__ == "__main__":
    key = jax.random.PRNGKey(0)
    k1, k2, k3, k4, k5 = jax.random.split(key, 5)

    # --- case 1: small (batch=2, seq=8, skills=16), all f32, single block ---
    B, S, K = 2, 8, 16
    pred = jax.nn.sigmoid(jax.random.normal(k1, (B, S, K), jnp.float32))
    truth = (jax.random.uniform(k2, (B, S, K)) > 0.5).astype(jnp.float32)
    lengths = jnp.array([6, 5], jnp.int32)
    step = jnp.arange(S)[None, :, None]
    mask = (step < lengths[:, None, None]).astype(jnp.float32) * jnp.ones((B, S, K))
    cluster_loss = jnp.float32(0.37)

    loss = total_loss(pred, truth, cluster_loss, mask)
    jax.block_until_ready(loss)
    ref = _reference(pred, truth, cluster_loss, mask)
    assert jnp.allclose(loss, ref, rtol=1e-5, atol=1e-5), (loss, ref)

    # --- case 2: bf16 truth/mask, numel % 128 != 0 (pad fallback), multiple
    #     blocks with a ragged last block (forced via max_block_rows=16) ------
    B2, S2, K2 = 4, 30, 50
    pred2 = jax.nn.sigmoid(jax.random.normal(k3, (B2, S2, K2), jnp.float32))
    truth2 = (jax.random.uniform(k4, (B2, S2, K2)) > 0.5).astype(jnp.bfloat16)
    lengths2 = jax.random.randint(k5, (B2,), 1, S2 + 1)
    step2 = jnp.arange(S2)[None, :, None]
    mask2 = (step2 < lengths2[:, None, None]).astype(jnp.bfloat16) * jnp.ones(
        (B2, S2, K2), jnp.bfloat16)
    cluster_loss2 = jnp.float32(1.25)

    loss2 = total_loss(pred2, truth2, cluster_loss2, mask2, max_block_rows=16)
    jax.block_until_ready(loss2)
    ref2 = _reference(pred2, truth2, cluster_loss2, mask2)
    assert jnp.allclose(loss2, ref2, rtol=1e-4, atol=1e-5), (loss2, ref2)

    # --- case 3: hard-label fast path (truth here is exactly {0,1}) ----------
    loss3 = total_loss(pred, truth, cluster_loss, mask, assume_hard_labels=True)
    jax.block_until_ready(loss3)
    assert jnp.allclose(loss3, ref, rtol=1e-5, atol=1e-5), (loss3, ref)

    print("KERNEL_OK")
</pallas_src>

<mosaic_0001>
module attributes {stable_mosaic.version = 11 : i64} {
  func.func @_total_loss_kernel(%arg0: i32, %arg1: memref<2x128xf32, #tpu.memory_space<vmem>>, %arg2: memref<2x128xf32, #tpu.memory_space<vmem>>, %arg3: memref<2x128xf32, #tpu.memory_space<vmem>>, %arg4: memref<1x1x128xf32, #tpu.memory_space<vmem>>, %arg5: memref<1x1x128xf32, #tpu.memory_space<vmem>>) attributes {dimension_semantics = [#tpu.dimension_semantics<arbitrary>], iteration_bounds = array<i64: 1>, scalar_prefetch = 0 : i64, scratch_operands = 0 : i64, tpu.core_type = #tpu.core_type<tc>, window_params = [{transform_indices = @transform_0, window_bounds = array<i64: 2, 128>}, {transform_indices = @transform_1, window_bounds = array<i64: 2, 128>}, {transform_indices = @transform_2, window_bounds = array<i64: 2, 128>}, {pipeline_mode = #tpu.pipeline_mode<synchronous>, transform_indices = @transform_3, window_bounds = array<i64: 1, 1, 128>}, {pipeline_mode = #tpu.pipeline_mode<synchronous>, transform_indices = @transform_4, window_bounds = array<i64: 1, 1, 128>}]} {
    %c0_i32 = arith.constant 0 : i32
    %0 = arith.cmpi eq, %arg0, %c0_i32 : i32
    %1 = arith.extui %0 : i1 to i32
    %c0_i32_0 = arith.constant 0 : i32
    %2 = arith.cmpi ne, %1, %c0_i32_0 : i32
    scf.if %2 {
      %cst_26 = arith.constant 0.000000e+00 : f32
      %43 = vector.broadcast %cst_26 : f32 to vector<1x128xf32>
      %c0_27 = arith.constant 0 : index
      %c0_28 = arith.constant 0 : index
      %c0_29 = arith.constant 0 : index
      %44 = vector.load %arg4[%c0_27, %c0_28, %c0_29] : memref<1x1x128xf32, #tpu.memory_space<vmem>>, vector<1x1x128xf32>
      %45 = vector.shape_cast %44 : vector<1x1x128xf32> to vector<1x128xf32>
      %46 = vector.shape_cast %43 : vector<1x128xf32> to vector<1x1x128xf32>
      tpu.vector_store %arg4[%c0_27, %c0_28, %c0_29], %46 {strides = array<i32>} : memref<1x1x128xf32, #tpu.memory_space<vmem>>, vector<1x1x128xf32>,
      %cst_30 = arith.constant 0.000000e+00 : f32
      %47 = vector.broadcast %cst_30 : f32 to vector<1x128xf32>
      %c0_31 = arith.constant 0 : index
      %c0_32 = arith.constant 0 : index
      %c0_33 = arith.constant 0 : index
      %48 = vector.load %arg5[%c0_31, %c0_32, %c0_33] : memref<1x1x128xf32, #tpu.memory_space<vmem>>, vector<1x1x128xf32>
      %49 = vector.shape_cast %48 : vector<1x1x128xf32> to vector<1x128xf32>
      %50 = vector.shape_cast %47 : vector<1x128xf32> to vector<1x1x128xf32>
      tpu.vector_store %arg5[%c0_31, %c0_32, %c0_33], %50 {strides = array<i32>} : memref<1x1x128xf32, #tpu.memory_space<vmem>>, vector<1x1x128xf32>,
    } else {
    }
    %c0 = arith.constant 0 : index
    %c0_1 = arith.constant 0 : index
    %3 = vector.load %arg1[%c0, %c0_1] : memref<2x128xf32, #tpu.memory_space<vmem>>, vector<2x128xf32>
    %c0_2 = arith.constant 0 : index
    %c0_3 = arith.constant 0 : index
    %4 = vector.load %arg3[%c0_2, %c0_3] : memref<2x128xf32, #tpu.memory_space<vmem>>, vector<2x128xf32>
    %cst = arith.constant 0.000000e+00 : f32
    %5 = vector.broadcast %cst : f32 to vector<2x128xf32>
    %6 = arith.cmpf ogt, %4, %5 : vector<2x128xf32>
    %c0_4 = arith.constant 0 : index
    %c0_5 = arith.constant 0 : index
    %7 = vector.load %arg2[%c0_4, %c0_5] : memref<2x128xf32, #tpu.memory_space<vmem>>, vector<2x128xf32>
    %8 = math.log %3 : vector<2x128xf32>
    %cst_6 = arith.constant -1.000000e+02 : f32
    %9 = vector.broadcast %cst_6 : f32 to vector<2x128xf32>
    %10 = arith.maximumf %8, %9 : vector<2x128xf32>
    %cst_7 = arith.constant 0.000000e+00 : f32
    %11 = vector.broadcast %cst_7 : f32 to vector<2x128xf32>
    %12 = arith.subf %11, %3 : vector<2x128xf32>
    %13 = math.log1p %12 : vector<2x128xf32>
    %cst_8 = arith.constant -1.000000e+02 : f32
    %14 = vector.broadcast %cst_8 : f32 to vector<2x128xf32>
    %15 = arith.maximumf %13, %14 : vector<2x128xf32>
    %16 = arith.mulf %7, %10 : vector<2x128xf32>
    %cst_9 = arith.constant 1.000000e+00 : f32
    %17 = vector.broadcast %cst_9 : f32 to vector<2x128xf32>
    %18 = arith.subf %17, %7 : vector<2x128xf32>
    %19 = arith.mulf %18, %15 : vector<2x128xf32>
    %20 = arith.addf %16, %19 : vector<2x128xf32>
    %cst_10 = arith.constant 0.000000e+00 : f32
    %21 = vector.broadcast %cst_10 : f32 to vector<2x128xf32>
    %22 = arith.subf %21, %20 : vector<2x128xf32>
    %cst_11 = arith.constant 0.000000e+00 : f32
    %23 = vector.broadcast %cst_11 : f32 to vector<2x128xf32>
    %24 = arith.select %6, %22, %23 : vector<2x128xi1>, vector<2x128xf32>
    %c0_12 = arith.constant 0 : index
    %c0_13 = arith.constant 0 : index
    %c0_14 = arith.constant 0 : index
    %25 = vector.load %arg4[%c0_12, %c0_13, %c0_14] : memref<1x1x128xf32, #tpu.memory_space<vmem>>, vector<1x1x128xf32>
    %26 = vector.shape_cast %25 : vector<1x1x128xf32> to vector<1x128xf32>
    %cst_15 = arith.constant dense<0.000000e+00> : vector<128xf32>
    %27 = vector.multi_reduction <add>, %24, %cst_15 [0] : vector<2x128xf32> to vector<128xf32>
    %28 = vector.shape_cast %27 : vector<128xf32> to vector<1x128xf32>
    %29 = arith.addf %26, %28 : vector<1x128xf32>
    %c0_16 = arith.constant 0 : index
    %c0_17 = arith.constant 0 : index
    %c0_18 = arith.constant 0 : index
    %30 = vector.load %arg4[%c0_16, %c0_17, %c0_18] : memref<1x1x128xf32, #tpu.memory_space<vmem>>, vector<1x1x128xf32>
    %31 = vector.shape_cast %30 : vector<1x1x128xf32> to vector<1x128xf32>
    %32 = vector.shape_cast %29 : vector<1x128xf32> to vector<1x1x128xf32>
    tpu.vector_store %arg4[%c0_16, %c0_17, %c0_18], %32 {strides = array<i32>} : memref<1x1x128xf32, #tpu.memory_space<vmem>>, vector<1x1x128xf32>,
    %c0_19 = arith.constant 0 : index
    %c0_20 = arith.constant 0 : index
    %c0_21 = arith.constant 0 : index
    %33 = vector.load %arg5[%c0_19, %c0_20, %c0_21] : memref<1x1x128xf32, #tpu.memory_space<vmem>>, vector<1x1x128xf32>
    %34 = vector.shape_cast %33 : vector<1x1x128xf32> to vector<1x128xf32>
    %35 = arith.extui %6 : vector<2x128xi1> to vector<2x128xi32>
    %36 = arith.sitofp %35 : vector<2x128xi32> to vector<2x128xf32>
    %cst_22 = arith.constant dense<0.000000e+00> : vector<128xf32>
    %37 = vector.multi_reduction <add>, %36, %cst_22 [0] : vector<2x128xf32> to vector<128xf32>
    %38 = vector.shape_cast %37 : vector<128xf32> to vector<1x128xf32>
    %39 = arith.addf %34, %38 : vector<1x128xf32>
    %c0_23 = arith.constant 0 : index
    %c0_24 = arith.constant 0 : index
    %c0_25 = arith.constant 0 : index
    %40 = vector.load %arg5[%c0_23, %c0_24, %c0_25] : memref<1x1x128xf32, #tpu.memory_space<vmem>>, vector<1x1x128xf32>
    %41 = vector.shape_cast %40 : vector<1x1x128xf32> to vector<1x128xf32>
    %42 = vector.shape_cast %39 : vector<1x128xf32> to vector<1x1x128xf32>
    tpu.vector_store %arg5[%c0_23, %c0_24, %c0_25], %42 {strides = array<i32>} : memref<1x1x128xf32, #tpu.memory_space<vmem>>, vector<1x1x128xf32>,
    return
  }
  func.func @transform_0(%arg0: i32) -> (i32, i32) {
    %c0_i32 = arith.constant 0 : i32
    %c0_i32_0 = arith.constant 0 : i32
    return %arg0, %c0_i32 : i32, i32
  }
  func.func @transform_1(%arg0: i32) -> (i32, i32) {
    %c0_i32 = arith.constant 0 : i32
    %c0_i32_0 = arith.constant 0 : i32
    return %arg0, %c0_i32 : i32, i32
  }
  func.func @transform_2(%arg0: i32) -> (i32, i32) {
    %c0_i32 = arith.constant 0 : i32
    %c0_i32_0 = arith.constant 0 : i32
    return %arg0, %c0_i32 : i32, i32
  }
  func.func @transform_3(%arg0: i32) -> (i32, i32, i32) {
    %c0_i32 = arith.constant 0 : i32
    %c0_i32_0 = arith.constant 0 : i32
    %c0_i32_1 = arith.constant 0 : i32
    %c0_i32_2 = arith.constant 0 : i32
    return %c0_i32, %c0_i32_0, %c0_i32_1 : i32, i32, i32
  }
  func.func @transform_4(%arg0: i32) -> (i32, i32, i32) {
    %c0_i32 = arith.constant 0 : i32
    %c0_i32_0 = arith.constant 0 : i32
    %c0_i32_1 = arith.constant 0 : i32
    %c0_i32_2 = arith.constant 0 : i32
    return %c0_i32, %c0_i32_0, %c0_i32_1 : i32, i32, i32
  }
}

</mosaic_0001>

<llo_original>
// kernel: total_loss.1
$region0: #{total_loss.1}
  #allocation0 [shape = 'u32[]', space=smem, size = 0x4, offset = 0x4, fixed_abs, tag = 'smem constant byte address 0x4 - core index']
  #allocation1 [shape = 'u32[144,128]{1,0:T(1,128)}', space=vmem, size = 0x12000, scoped, tag = 'internal scratch']
  %s0 = inlined_call_operand.vmem [shape: f32[2,128], index: 0, kind: input, shape index: {}]
  %s1 = inlined_call_operand.vmem [shape: f32[2,128], index: 1, kind: input, shape index: {}]
  %s2 = inlined_call_operand.vmem [shape: f32[2,128], index: 2, kind: input, shape index: {}]
  %s3 = inlined_call_operand.vmem [shape: f32[1,1,128], index: 3, kind: output, shape index: {0}]
  %s4 = inlined_call_operand.vmem [shape: f32[1,1,128], index: 4, kind: output, shape index: {1}]
  %5 = xla_tuple %s3, %s4
  %s6 = sld [smem:[#allocation0]]
  $region34: #{total_loss.1} parent=0
    _
  %s8 = ssub.s32 1, %s6
  %s9 = scalar_select 0, %s8, %s6
  // Predicated region
  $region2: #{total_loss.1} parent=0 // pred_check
    _
  $region3: #{total_loss.1} parent=0 // pred_check_branch
    %11 = sbr.rel (0) target = $region5
  $region4: #{total_loss.1} parent=0 // pred_region
    _
  $region5: #{total_loss.1} parent=0 // pred_fallthru
    _
  // Predicated region
  $region6: #{total_loss.1} parent=0 // pred_check
    _
  $region7: #{total_loss.1} parent=0 // pred_check_branch
    %13 = sbr.rel (0) target = $region9
  $region8: #{total_loss.1} parent=0 // pred_region
    _
  $region9: #{total_loss.1} parent=0 // pred_fallthru
    _
  // Predicated region
  $region10: #{total_loss.1} parent=0 // pred_check
    _
  $region11: #{total_loss.1} parent=0 // pred_check_branch
    %15 = sbr.rel (0) target = $region13
  $region12: #{total_loss.1} parent=0 // pred_region
    _
  $region13: #{total_loss.1} parent=0 // pred_fallthru
    _
  %p16 = scmp.eq.s32.totalorder 0, 0
  // Predicated region
  $region14: #{total_loss.1} parent=0 // pred_check
    %p17 = pneg %p16
  $region15: #{total_loss.1} parent=0 // pred_check_branch
    %19 = sbr.rel (%p17) target = $region17
  $region16: #{total_loss.1} parent=0 // pred_region
    %20 = vst [vmem:[%s3] sm:$0x1] 0.0
    %21 = vst [vmem:[%s4] sm:$0x1] 0.0
  $region17: #{total_loss.1} parent=0 // pred_fallthru
    _
  %v22 = vld [vmem:[%s0] sm:$0x3]
  %v23 = vld [vmem:[%s2] sm:$0x3]
  %vm24 = vcmp.gt.f32.partialorder %v23, 0.0
  %v25 = vld [vmem:[%s1] sm:$0x3]
  %v26 = vlog2.pop %v22
  %v27 = vmul.f32 %v26, 0.6931472
  %v28 = vmax.f32 %v27, -100.0
  %v29 = vsub.f32 0.0, %v22
  %v30 = vadd.f32 %v29, 1.0
  %v31 = vlog2.pop %v30
  %v32 = vmul.f32 %v31, 0.6931472
  %v33 = vmul.f32 -0.5, %v29
  %v34 = vadd.f32 %v33, 1.0
  %v35 = vmul.f32 %v34, %v29
  %v36 = vand.u32 2147483647, %v29
  %vm37 = vcmp.lt.f32.partialorder %v36, 0.0004427343
  %v38 = vsel %vm37, %v35, %v32
  %v39 = vmax.f32 %v38, -100.0
  %v40 = vmul.f32 %v25, %v28
  %v41 = vsub.f32 1.0, %v25
  %v42 = vmul.f32 %v41, %v39
  %v43 = vadd.f32 %v40, %v42
  %v44 = vsub.f32 0.0, %v43
  %v45 = vsel %vm24, %v44, 0.0
  %v46 = vld [vmem:[%s3] sm:$0x1]
  %vm47 = vcmask 1041408
  %v48 = vsel %vm47, %v45, 0.0
  %v49 = vrot.slane %v48, 4
  %v50 = vadd.f32 %v48, %v49
  %v51 = vrot.slane %v50, 2
  %v52 = vadd.f32 %v50, %v51
  %v53 = vrot.slane %v52, 1
  %v54 = vadd.f32 %v52, %v53
  %v55 = vadd.f32 %v46, %v54
  %56 = vst [vmem:[%s3] sm:$0x1] %v55
  %v57 = vld [vmem:[%s4] sm:$0x1]
  %v58 = vsel %vm24, 1, 0
  %v59 = vcvt.s32.f32 %v58
  %v60 = vsel %vm47, %v59, 0.0
  %v61 = vrot.slane %v60, 4
  %v62 = vadd.f32 %v60, %v61
  %v63 = vrot.slane %v62, 2
  %v64 = vadd.f32 %v62, %v63
  %v65 = vrot.slane %v64, 1
  %v66 = vadd.f32 %v64, %v65
  %v67 = vadd.f32 %v57, %v66
  %68 = vst [vmem:[%s4] sm:$0x1] %v67
  // Predicated region
  $region18: #{total_loss.1} parent=0 // pred_check
    _
  $region19: #{total_loss.1} parent=0 // pred_check_branch
    %70 = sbr.rel (0) target = $region21
  $region20: #{total_loss.1} parent=0 // pred_region
    _
  $region21: #{total_loss.1} parent=0 // pred_fallthru
    _
  // Predicated region
  $region22: #{total_loss.1} parent=0 // pred_check
    _
  $region23: #{total_loss.1} parent=0 // pred_check_branch
    %72 = sbr.rel (0) target = $region25
  $region24: #{total_loss.1} parent=0 // pred_region
    _
  $region25: #{total_loss.1} parent=0 // pred_fallthru
    _
  // Predicated region
  $region26: #{total_loss.1} parent=0 // pred_check
    _
  $region27: #{total_loss.1} parent=0 // pred_check_branch
    %74 = sbr.rel (0) target = $region29
  $region28: #{total_loss.1} parent=0 // pred_region
    _
  $region29: #{total_loss.1} parent=0 // pred_fallthru
    _
  // Predicated region
  $region30: #{total_loss.1} parent=0 // pred_check
    _
  $region31: #{total_loss.1} parent=0 // pred_check_branch
    %76 = sbr.rel (0) target = $region33
  $region32: #{total_loss.1} parent=0 // pred_region
    _
  $region33: #{total_loss.1} parent=0 // pred_fallthru
    _

</llo_original>
